<compile_context>
chip_gen: v7x
topology: tpu7x:2x2x1
jax: 0.10.0
libtpu: 0.0.40
codegen_flags: <defaults>
</compile_context>

<pallas_src>
import functools

import jax
import jax.numpy as jnp
from jax.experimental import pallas as pl
from jax.experimental.pallas import tpu as pltpu

N_FEATURES = 8
HIDDEN = (16, 32, 64)
N_OUT = 5
N_OUT_PAD = 8            # full 8-sublane output tile -> unmasked vst
_LANE = 128

# a @ b.T : contract the minor dim of both operands (flash-attention QK^T
# pattern).  Lets the kernel read x in its native (batch, feature) layout
# while producing a batch-on-lanes result -- no wrapper transpose needed.
_NT_DIMS = (((1,), (1,)), ((), ()))


def _round_up(n, m):
    return (n + m - 1) // m * m


def dqn_kernel(x_ref,
               w1_ref, b1_ref,
               w2_ref, b2_ref,
               w3_ref, b3_ref,
               w4_ref, b4_ref,
               o_ref):
    # x_ref : (TB, n_features)   natural batch-major input tile
    # wN/bN : folded weights (out, in) / biases (out, 1), VMEM-resident
    # o_ref : (N_OUT_PAD, TB)    batch-on-lanes, lane-dense output tile
    #
    # Layer 1 contracts W1' against x's feature axis ("NT" matmul), so the
    # batch lands on the lane axis from the first MXU op on; the (16/32/64, TB)
    # activations and the (8, TB) output stay lane-dense.
    t = jnp.tanh(
        jax.lax.dot_general(w1_ref[...], x_ref[...], _NT_DIMS,
                            preferred_element_type=jnp.float32)
        + b1_ref[...])
    t = jnp.tanh(jnp.dot(w2_ref[...], t, preferred_element_type=jnp.float32)
                 + b2_ref[...])
    t = jnp.tanh(jnp.dot(w3_ref[...], t, preferred_element_type=jnp.float32)
                 + b3_ref[...])
    # TODO(synk): nn.Dropout(0.5) is identity in eval/inference mode; the
    # training-mode random mask + 2x rescale is not implemented here.
    o_ref[...] = (jnp.dot(w4_ref[...], t, preferred_element_type=jnp.float32)
                  + b4_ref[...])


@functools.partial(jax.jit, static_argnames=("tb", "transposed_output"))
def dqn_forward(x, folded_params, tb=8192, transposed_output=False):
    """x: (B, n_features) f32.  folded_params: output of fold_sigmoid_affine().

    Returns (B, 5) by default (PyTorch-facing layout).  With
    transposed_output=True returns (5, B) with zero extra layout ops --
    use it if the surrounding program can stay in feature-major layout.
    """
    w1, b1, w2, b2, w3, b3, w4, b4 = folded_params
    B, nf = x.shape

    # ---- batch tile selection -------------------------------------------
    # Large lane tile (multiple of 128) to amortize per-grid-step overhead;
    # clamp to the rounded-up batch, and cap so big batches keep >= 2 grid
    # steps for megacore ("parallel") sharding on v7x.
    tb_eff = max(_LANE, min(tb, _round_up(B, _LANE)))
    half = _round_up((B + 1) // 2, _LANE)
    if half >= 1024:
        tb_eff = min(tb_eff, half)
    bp = _round_up(B, tb_eff)
    grid = (bp // tb_eff,)

    # Batch-axis pad only when needed (never a transpose; a no-op whenever the
    # caller's batch is already a multiple of the tile).
    if bp != B:
        x = jnp.pad(x, ((0, bp - B), (0, 0)))

    def resident(shape):
        # Whole-array block with a constant block index -> weights/biases stay
        # VMEM-resident across grid steps (no per-step re-DMA of ~7 KB).
        return pl.BlockSpec(shape, lambda i: (0, 0))

    flops = 2 * bp * (nf * 16 + 16 * 32 + 32 * 64 + 64 * N_OUT_PAD)
    transcendentals = bp * sum(HIDDEN)
    param_bytes = sum(int(p.size) * 4 for p in folded_params)
    bytes_accessed = 4 * bp * (nf + N_OUT_PAD) + param_bytes

    out_t = pl.pallas_call(
        dqn_kernel,
        out_shape=jax.ShapeDtypeStruct((N_OUT_PAD, bp), jnp.float32),
        grid=grid,
        in_specs=[
            pl.BlockSpec((tb_eff, nf), lambda i: (i, 0)),
            resident(w1.shape), resident(b1.shape),
            resident(w2.shape), resident(b2.shape),
            resident(w3.shape), resident(b3.shape),
            resident(w4.shape), resident(b4.shape),
        ],
        out_specs=pl.BlockSpec((N_OUT_PAD, tb_eff), lambda i: (0, i)),
        compiler_params=pltpu.CompilerParams(
            dimension_semantics=("parallel",),
            vmem_limit_bytes=32 * 1024 * 1024),
        cost_estimate=pl.CostEstimate(
            flops=flops,
            transcendentals=transcendentals,
            bytes_accessed=bytes_accessed),
    )(x, w1, b1, w2, b2, w3, b3, w4, b4)

    if transposed_output:
        return out_t[:N_OUT, :B]      # (5, B): no layout op at all
    return out_t[:N_OUT, :B].T        # PyTorch-facing (B, 5): tiny transpose


def init_params(key, n_features=N_FEATURES):
    """Mirror the PyTorch module init: weights ~ N(0, 1) (nn.init.normal_) in
    PyTorch (out, in) layout; biases ~ U(-1/sqrt(fan_in), 1/sqrt(fan_in))
    (nn.Linear default), stored as (out, 1)."""
    dims = [n_features, *HIDDEN, N_OUT]
    params = []
    for i in range(4):
        fan_in, fan_out = dims[i], dims[i + 1]
        key, kw, kb = jax.random.split(key, 3)
        w = jax.random.normal(kw, (fan_out, fan_in), dtype=jnp.float32)
        bound = 1.0 / (fan_in ** 0.5)
        b = jax.random.uniform(kb, (fan_out, 1), dtype=jnp.float32,
                               minval=-bound, maxval=bound)
        params.extend([w, b])
    return tuple(params)


def fold_sigmoid_affine(params):
    """One-time parameter transform (outside the hot path).

    Uses sigmoid(z) = 0.5*tanh(0.5*z) + 0.5 and folds the "0.5*t + 0.5" affine
    of each hidden activation into the *next* layer, so the kernel only needs
    tanh (one EUP transcendental) plus a bias add per hidden layer:
        W1' = 0.5*W1,   b1' = 0.5*b1
        Wk' = 0.25*Wk,  bk' = 0.5*bk + 0.25*Wk@1       (k = 2, 3)
        W4' = 0.5*W4,   b4' = b4 + 0.5*W4@1
    Also zero-pads the output layer from 5 to 8 rows so the kernel's (8, TB)
    output tile is a full-sublane unmasked store.
    """
    w1, b1, w2, b2, w3, b3, w4, b4 = params
    folded = [0.5 * w1, 0.5 * b1]
    for w, b in ((w2, b2), (w3, b3)):
        folded += [0.25 * w,
                   0.5 * b + 0.25 * jnp.sum(w, axis=1, keepdims=True)]
    w4f = 0.5 * w4
    b4f = b4 + 0.5 * jnp.sum(w4, axis=1, keepdims=True)
    pad = N_OUT_PAD - w4.shape[0]
    folded += [jnp.pad(w4f, ((0, pad), (0, 0))),
               jnp.pad(b4f, ((0, pad), (0, 0)))]
    return tuple(folded)


def reference_forward(x, params):
    """Plain-JAX reference matching the PyTorch forward (eval-mode dropout)."""
    w1, b1, w2, b2, w3, b3, w4, b4 = params
    h = jax.nn.sigmoid(x @ w1.T + b1.T)
    h = jax.nn.sigmoid(h @ w2.T + b2.T)
    h = jax.nn.sigmoid(h @ w3.T + b3.T)
    return h @ w4.T + b4.T


if __name__ == "__main__":
    key = jax.random.PRNGKey(0)
    key, kx1, kx2, kx3 = jax.random.split(key, 4)

    params = init_params(key, n_features=N_FEATURES)
    folded = fold_sigmoid_affine(params)

    # Small batch (single 128-wide tile after clamping).
    x1 = jax.random.normal(kx1, (4, N_FEATURES), dtype=jnp.float32)
    out1 = jax.block_until_ready(dqn_forward(x1, folded))
    ref1 = reference_forward(x1, params)
    assert out1.shape == (4, N_OUT)
    assert jnp.allclose(out1, ref1, atol=1e-3, rtol=1e-3)

    # Ragged batch: exercises the conditional batch-padding path.
    x2 = jax.random.normal(kx2, (300, N_FEATURES), dtype=jnp.float32)
    out2 = jax.block_until_ready(dqn_forward(x2, folded))
    ref2 = reference_forward(x2, params)
    assert out2.shape == (300, N_OUT)
    assert jnp.allclose(out2, ref2, atol=1e-3, rtol=1e-3)

    # Batch large enough to take >= 2 grid steps (megacore/"parallel" path).
    x3 = jax.random.normal(kx3, (4096, N_FEATURES), dtype=jnp.float32)
    out3 = jax.block_until_ready(dqn_forward(x3, folded))
    ref3 = reference_forward(x3, params)
    assert out3.shape == (4096, N_OUT)
    assert jnp.allclose(out3, ref3, atol=1e-3, rtol=1e-3)

    print("KERNEL_OK")
</pallas_src>

<mosaic_0001>
module attributes {stable_mosaic.version = 11 : i64} {
  func.func @dqn_kernel(%arg0: i32, %arg1: memref<128x8xf32, #tpu.memory_space<vmem>>, %arg2: memref<16x8xf32, #tpu.memory_space<vmem>>, %arg3: memref<16x1xf32, #tpu.memory_space<vmem>>, %arg4: memref<32x16xf32, #tpu.memory_space<vmem>>, %arg5: memref<32x1xf32, #tpu.memory_space<vmem>>, %arg6: memref<64x32xf32, #tpu.memory_space<vmem>>, %arg7: memref<64x1xf32, #tpu.memory_space<vmem>>, %arg8: memref<8x64xf32, #tpu.memory_space<vmem>>, %arg9: memref<8x1xf32, #tpu.memory_space<vmem>>, %arg10: memref<8x128xf32, #tpu.memory_space<vmem>>) attributes {dimension_semantics = [#tpu.dimension_semantics<parallel>], iteration_bounds = array<i64: 1>, scalar_prefetch = 0 : i64, scratch_operands = 0 : i64, tpu.core_type = #tpu.core_type<tc>, window_params = [{transform_indices = @transform_0, window_bounds = array<i64: 128, 8>}, {pipeline_mode = #tpu.pipeline_mode<synchronous>, transform_indices = @transform_1, window_bounds = array<i64: 16, 8>}, {pipeline_mode = #tpu.pipeline_mode<synchronous>, transform_indices = @transform_2, window_bounds = array<i64: 16, 1>}, {pipeline_mode = #tpu.pipeline_mode<synchronous>, transform_indices = @transform_3, window_bounds = array<i64: 32, 16>}, {pipeline_mode = #tpu.pipeline_mode<synchronous>, transform_indices = @transform_4, window_bounds = array<i64: 32, 1>}, {pipeline_mode = #tpu.pipeline_mode<synchronous>, transform_indices = @transform_5, window_bounds = array<i64: 64, 32>}, {pipeline_mode = #tpu.pipeline_mode<synchronous>, transform_indices = @transform_6, window_bounds = array<i64: 64, 1>}, {pipeline_mode = #tpu.pipeline_mode<synchronous>, transform_indices = @transform_7, window_bounds = array<i64: 8, 64>}, {pipeline_mode = #tpu.pipeline_mode<synchronous>, transform_indices = @transform_8, window_bounds = array<i64: 8, 1>}, {transform_indices = @transform_9, window_bounds = array<i64: 8, 128>}]} {
    %c0 = arith.constant 0 : index
    %c0_0 = arith.constant 0 : index
    %0 = vector.load %arg2[%c0, %c0_0] : memref<16x8xf32, #tpu.memory_space<vmem>>, vector<16x8xf32>
    %c0_1 = arith.constant 0 : index
    %c0_2 = arith.constant 0 : index
    %1 = vector.load %arg1[%c0_1, %c0_2] : memref<128x8xf32, #tpu.memory_space<vmem>>, vector<128x8xf32>
    %cst = arith.constant dense<0.000000e+00> : vector<16x128xf32>
    %2 = tpu.matmul %0, %1, %cst {dimension_numbers = #tpu.dot_dimension_numbers<[1], [1], [0], [0], [0, 0, 1, 0], [], []>} : vector<16x8xf32>, vector<128x8xf32>, vector<16x128xf32> -> vector<16x128xf32>
    %c0_3 = arith.constant 0 : index
    %c0_4 = arith.constant 0 : index
    %3 = vector.load %arg3[%c0_3, %c0_4] : memref<16x1xf32, #tpu.memory_space<vmem>>, vector<16x1xf32>
    %4 = vector.broadcast %3 : vector<16x1xf32> to vector<16x128xf32>
    %5 = arith.addf %2, %4 : vector<16x128xf32>
    %6 = math.tanh %5 : vector<16x128xf32>
    %c0_5 = arith.constant 0 : index
    %c0_6 = arith.constant 0 : index
    %7 = vector.load %arg4[%c0_5, %c0_6] : memref<32x16xf32, #tpu.memory_space<vmem>>, vector<32x16xf32>
    %cst_7 = arith.constant dense<0.000000e+00> : vector<32x128xf32>
    %8 = tpu.matmul %7, %6, %cst_7 {dimension_numbers = #tpu.dot_dimension_numbers<[1], [0], [0], [1], [0, 0, 1, 1], [], []>} : vector<32x16xf32>, vector<16x128xf32>, vector<32x128xf32> -> vector<32x128xf32>
    %c0_8 = arith.constant 0 : index
    %c0_9 = arith.constant 0 : index
    %9 = vector.load %arg5[%c0_8, %c0_9] : memref<32x1xf32, #tpu.memory_space<vmem>>, vector<32x1xf32>
    %10 = vector.broadcast %9 : vector<32x1xf32> to vector<32x128xf32>
    %11 = arith.addf %8, %10 : vector<32x128xf32>
    %12 = math.tanh %11 : vector<32x128xf32>
    %c0_10 = arith.constant 0 : index
    %c0_11 = arith.constant 0 : index
    %13 = vector.load %arg6[%c0_10, %c0_11] : memref<64x32xf32, #tpu.memory_space<vmem>>, vector<64x32xf32>
    %cst_12 = arith.constant dense<0.000000e+00> : vector<64x128xf32>
    %14 = tpu.matmul %13, %12, %cst_12 {dimension_numbers = #tpu.dot_dimension_numbers<[1], [0], [0], [1], [0, 0, 1, 1], [], []>} : vector<64x32xf32>, vector<32x128xf32>, vector<64x128xf32> -> vector<64x128xf32>
    %c0_13 = arith.constant 0 : index
    %c0_14 = arith.constant 0 : index
    %15 = vector.load %arg7[%c0_13, %c0_14] : memref<64x1xf32, #tpu.memory_space<vmem>>, vector<64x1xf32>
    %16 = vector.broadcast %15 : vector<64x1xf32> to vector<64x128xf32>
    %17 = arith.addf %14, %16 : vector<64x128xf32>
    %18 = math.tanh %17 : vector<64x128xf32>
    %c0_15 = arith.constant 0 : index
    %c0_16 = arith.constant 0 : index
    %19 = vector.load %arg8[%c0_15, %c0_16] : memref<8x64xf32, #tpu.memory_space<vmem>>, vector<8x64xf32>
    %cst_17 = arith.constant dense<0.000000e+00> : vector<8x128xf32>
    %20 = tpu.matmul %19, %18, %cst_17 {dimension_numbers = #tpu.dot_dimension_numbers<[1], [0], [0], [1], [0, 0, 1, 1], [], []>} : vector<8x64xf32>, vector<64x128xf32>, vector<8x128xf32> -> vector<8x128xf32>
    %c0_18 = arith.constant 0 : index
    %c0_19 = arith.constant 0 : index
    %21 = vector.load %arg9[%c0_18, %c0_19] : memref<8x1xf32, #tpu.memory_space<vmem>>, vector<8x1xf32>
    %22 = vector.broadcast %21 : vector<8x1xf32> to vector<8x128xf32>
    %23 = arith.addf %20, %22 : vector<8x128xf32>
    %c0_20 = arith.constant 0 : index
    %c0_21 = arith.constant 0 : index
    %24 = vector.load %arg10[%c0_20, %c0_21] : memref<8x128xf32, #tpu.memory_space<vmem>>, vector<8x128xf32>
    tpu.vector_store %arg10[%c0_20, %c0_21], %23 {strides = array<i32>} : memref<8x128xf32, #tpu.memory_space<vmem>>, vector<8x128xf32>,
    return
  }
  func.func @transform_0(%arg0: i32) -> (i32, i32) {
    %c0_i32 = arith.constant 0 : i32
    %c0_i32_0 = arith.constant 0 : i32
    return %arg0, %c0_i32 : i32, i32
  }
  func.func @transform_1(%arg0: i32) -> (i32, i32) {
    %c0_i32 = arith.constant 0 : i32
    %c0_i32_0 = arith.constant 0 : i32
    %c0_i32_1 = arith.constant 0 : i32
    return %c0_i32, %c0_i32_0 : i32, i32
  }
  func.func @transform_2(%arg0: i32) -> (i32, i32) {
    %c0_i32 = arith.constant 0 : i32
    %c0_i32_0 = arith.constant 0 : i32
    %c0_i32_1 = arith.constant 0 : i32
    return %c0_i32, %c0_i32_0 : i32, i32
  }
  func.func @transform_3(%arg0: i32) -> (i32, i32) {
    %c0_i32 = arith.constant 0 : i32
    %c0_i32_0 = arith.constant 0 : i32
    %c0_i32_1 = arith.constant 0 : i32
    return %c0_i32, %c0_i32_0 : i32, i32
  }
  func.func @transform_4(%arg0: i32) -> (i32, i32) {
    %c0_i32 = arith.constant 0 : i32
    %c0_i32_0 = arith.constant 0 : i32
    %c0_i32_1 = arith.constant 0 : i32
    return %c0_i32, %c0_i32_0 : i32, i32
  }
  func.func @transform_5(%arg0: i32) -> (i32, i32) {
    %c0_i32 = arith.constant 0 : i32
    %c0_i32_0 = arith.constant 0 : i32
    %c0_i32_1 = arith.constant 0 : i32
    return %c0_i32, %c0_i32_0 : i32, i32
  }
  func.func @transform_6(%arg0: i32) -> (i32, i32) {
    %c0_i32 = arith.constant 0 : i32
    %c0_i32_0 = arith.constant 0 : i32
    %c0_i32_1 = arith.constant 0 : i32
    return %c0_i32, %c0_i32_0 : i32, i32
  }
  func.func @transform_7(%arg0: i32) -> (i32, i32) {
    %c0_i32 = arith.constant 0 : i32
    %c0_i32_0 = arith.constant 0 : i32
    %c0_i32_1 = arith.constant 0 : i32
    return %c0_i32, %c0_i32_0 : i32, i32
  }
  func.func @transform_8(%arg0: i32) -> (i32, i32) {
    %c0_i32 = arith.constant 0 : i32
    %c0_i32_0 = arith.constant 0 : i32
    %c0_i32_1 = arith.constant 0 : i32
    return %c0_i32, %c0_i32_0 : i32, i32
  }
  func.func @transform_9(%arg0: i32) -> (i32, i32) {
    %c0_i32 = arith.constant 0 : i32
    %c0_i32_0 = arith.constant 0 : i32
    return %c0_i32, %arg0 : i32, i32
  }
}

</mosaic_0001>

<llo_original>
// kernel: dqn_forward.1
$region0: #{dqn_forward.1}
  #allocation0 [shape = 'u32[]', space=smem, size = 0x4, offset = 0x4, fixed_abs, tag = 'smem constant byte address 0x4 - core index']
  #allocation1 [shape = 'u32[144,128]{1,0:T(1,128)}', space=vmem, size = 0x12000, scoped, tag = 'internal scratch']
  %s0 = inlined_call_operand.vmem [shape: f32[128,8], index: 0, kind: input, shape index: {}]
  %s1 = inlined_call_operand.vmem [shape: f32[16,8], index: 1, kind: input, shape index: {}]
  %s2 = inlined_call_operand.vmem [shape: f32[16,1], index: 2, kind: input, shape index: {}]
  %s3 = inlined_call_operand.vmem [shape: f32[32,16], index: 3, kind: input, shape index: {}]
  %s4 = inlined_call_operand.vmem [shape: f32[32,1], index: 4, kind: input, shape index: {}]
  %s5 = inlined_call_operand.vmem [shape: f32[64,32], index: 5, kind: input, shape index: {}]
  %s6 = inlined_call_operand.vmem [shape: f32[64,1], index: 6, kind: input, shape index: {}]
  %s7 = inlined_call_operand.vmem [shape: f32[8,64], index: 7, kind: input, shape index: {}]
  %s8 = inlined_call_operand.vmem [shape: f32[8,1], index: 8, kind: input, shape index: {}]
  %s9 = inlined_call_operand.vmem [shape: f32[8,128], index: 9, kind: output, shape index: {}]
  %s10 = sld [smem:[#allocation0]]
  $region46: #{dqn_forward.1} parent=0
    _
  %s12 = ssub.s32 1, %s10
  %s13 = scalar_select 0, %s12, %s10
  // Predicated region
  $region2: #{dqn_forward.1} parent=0 // pred_check
    _
  $region3: #{dqn_forward.1} parent=0 // pred_check_branch
    %15 = sbr.rel (0) target = $region5
  $region4: #{dqn_forward.1} parent=0 // pred_region
    _
  $region5: #{dqn_forward.1} parent=0 // pred_fallthru
    _
  // Predicated region
  $region6: #{dqn_forward.1} parent=0 // pred_check
    _
  $region7: #{dqn_forward.1} parent=0 // pred_check_branch
    %17 = sbr.rel (0) target = $region9
  $region8: #{dqn_forward.1} parent=0 // pred_region
    _
  $region9: #{dqn_forward.1} parent=0 // pred_fallthru
    _
  // Predicated region
  $region10: #{dqn_forward.1} parent=0 // pred_check
    _
  $region11: #{dqn_forward.1} parent=0 // pred_check_branch
    %19 = sbr.rel (0) target = $region13
  $region12: #{dqn_forward.1} parent=0 // pred_region
    _
  $region13: #{dqn_forward.1} parent=0 // pred_fallthru
    _
  // Predicated region
  $region14: #{dqn_forward.1} parent=0 // pred_check
    _
  $region15: #{dqn_forward.1} parent=0 // pred_check_branch
    %21 = sbr.rel (0) target = $region17
  $region16: #{dqn_forward.1} parent=0 // pred_region
    _
  $region17: #{dqn_forward.1} parent=0 // pred_fallthru
    _
  // Predicated region
  $region18: #{dqn_forward.1} parent=0 // pred_check
    _
  $region19: #{dqn_forward.1} parent=0 // pred_check_branch
    %23 = sbr.rel (0) target = $region21
  $region20: #{dqn_forward.1} parent=0 // pred_region
    _
  $region21: #{dqn_forward.1} parent=0 // pred_fallthru
    _
  // Predicated region
  $region22: #{dqn_forward.1} parent=0 // pred_check
    _
  $region23: #{dqn_forward.1} parent=0 // pred_check_branch
    %25 = sbr.rel (0) target = $region25
  $region24: #{dqn_forward.1} parent=0 // pred_region
    _
  $region25: #{dqn_forward.1} parent=0 // pred_fallthru
    _
  // Predicated region
  $region26: #{dqn_forward.1} parent=0 // pred_check
    _
  $region27: #{dqn_forward.1} parent=0 // pred_check_branch
    %27 = sbr.rel (0) target = $region29
  $region28: #{dqn_forward.1} parent=0 // pred_region
    _
  $region29: #{dqn_forward.1} parent=0 // pred_fallthru
    _
  // Predicated region
  $region30: #{dqn_forward.1} parent=0 // pred_check
    _
  $region31: #{dqn_forward.1} parent=0 // pred_check_branch
    %29 = sbr.rel (0) target = $region33
  $region32: #{dqn_forward.1} parent=0 // pred_region
    _
  $region33: #{dqn_forward.1} parent=0 // pred_fallthru
    _
  // Predicated region
  $region34: #{dqn_forward.1} parent=0 // pred_check
    _
  $region35: #{dqn_forward.1} parent=0 // pred_check_branch
    %31 = sbr.rel (0) target = $region37
  $region36: #{dqn_forward.1} parent=0 // pred_region
    _
  $region37: #{dqn_forward.1} parent=0 // pred_fallthru
    _
  %v32 = vld [vmem:[%s1] sm:$0xff]
  %v33 = vld [vmem:[%s1 + $0x8] sm:$0xff]
  %v34 = vld [vmem:[%s0] sm:$0xff]
  %v35 = vld [vmem:[%s0 + $0x8] sm:$0xff]
  %v36 = vld [vmem:[%s0 + $0x10] sm:$0xff]
  %v37 = vld [vmem:[%s0 + $0x18] sm:$0xff]
  %v38 = vld [vmem:[%s0 + $0x20] sm:$0xff]
  %v39 = vld [vmem:[%s0 + $0x28] sm:$0xff]
  %v40 = vld [vmem:[%s0 + $0x30] sm:$0xff]
  %v41 = vld [vmem:[%s0 + $0x38] sm:$0xff]
  %v42 = vld [vmem:[%s0 + $0x40] sm:$0xff]
  %v43 = vld [vmem:[%s0 + $0x48] sm:$0xff]
  %v44 = vld [vmem:[%s0 + $0x50] sm:$0xff]
  %v45 = vld [vmem:[%s0 + $0x58] sm:$0xff]
  %v46 = vld [vmem:[%s0 + $0x60] sm:$0xff]
  %v47 = vld [vmem:[%s0 + $0x68] sm:$0xff]
  %v48 = vld [vmem:[%s0 + $0x70] sm:$0xff]
  %v49 = vld [vmem:[%s0 + $0x78] sm:$0xff]
  %v50 = vld [vmem:[%s2] sm:$0xff]
  %v51 = vld [vmem:[%s2 + $0x8] sm:$0xff]
  %53 = vset.pattern.permute.xlu0 0
  %54 = vperm.xlu0 %53, %v50
  %v55 = vpop.permute.xlu0 %54
  %58 = vset.pattern.permute.xlu0 0
  %59 = vperm.xlu0 %58, %v51
  %v60 = vpop.permute.xlu0 %59
  %vm62 = vcmask 64512
  %v64 = vsel %vm62, %v32, 0
  %v67 = vsel %vm62, %v33, 0
  %v70 = vsel %vm62, %v34, 0
  %v73 = vsel %vm62, %v35, 0
  %v76 = vsel %vm62, %v36, 0
  %v79 = vsel %vm62, %v37, 0
  %v82 = vsel %vm62, %v38, 0
  %v85 = vsel %vm62, %v39, 0
  %v88 = vsel %vm62, %v40, 0
  %v91 = vsel %vm62, %v41, 0
  %v94 = vsel %vm62, %v42, 0
  %v97 = vsel %vm62, %v43, 0
  %v100 = vsel %vm62, %v44, 0
  %v103 = vsel %vm62, %v45, 0
  %v106 = vsel %vm62, %v46, 0
  %v109 = vsel %vm62, %v47, 0
  %v112 = vsel %vm62, %v48, 0
  %v115 = vsel %vm62, %v49, 0
  %117 = vmatprep.subr.mxu0 0.0
  %118 = vmatpush1.xpose.msra.mxu0 %v70
  %119 = vmatprep.subr.mxu0 0.0
  %120 = vmatpush1.xpose.msra.mxu0 %v73
  %121 = vmatprep.subr.mxu0 0.0
  %122 = vmatpush1.xpose.msra.mxu0 %v76
  %123 = vmatprep.subr.mxu0 0.0
  %124 = vmatpush1.xpose.msra.mxu0 %v79
  %125 = vmatprep.subr.mxu0 0.0
  %126 = vmatpush1.xpose.msra.mxu0 %v82
  %127 = vmatprep.subr.mxu0 0.0
  %128 = vmatpush1.xpose.msra.mxu0 %v85
  %129 = vmatprep.subr.mxu0 0.0
  %130 = vmatpush1.xpose.msra.mxu0 %v88
  %131 = vmatprep.subr.mxu0 0.0
  %132 = vmatpush1.xpose.msra.mxu0 %v91
  %133 = vmatprep.subr.mxu0 0.0
  %134 = vmatpush1.xpose.msra.mxu0 %v94
  %135 = vmatprep.subr.mxu0 0.0
  %136 = vmatpush1.xpose.msra.mxu0 %v97
  %137 = vmatprep.subr.mxu0 0.0
  %138 = vmatpush1.xpose.msra.mxu0 %v100
  %139 = vmatprep.subr.mxu0 0.0
  %140 = vmatpush1.xpose.msra.mxu0 %v103
  %141 = vmatprep.subr.mxu0 0.0
  %142 = vmatpush1.xpose.msra.mxu0 %v106
  %143 = vmatprep.subr.mxu0 0.0
  %144 = vmatpush1.xpose.msra.mxu0 %v109
  %145 = vmatprep.subr.mxu0 0.0
  %146 = vmatpush1.xpose.msra.mxu0 %v112
  %147 = vmatprep.subr.mxu0 0.0
  %148 = vmatpush1.xpose.msra.mxu0 %v115
  %149 = vmatprep.subr.mxu0 0.0
  %150 = vmatpush1.xpose.msra.mxu0 0.0
  %151 = vmatprep.subr.mxu0 0.0
  %152 = vmatpush1.xpose.msra.mxu0 0.0
  %153 = vmatprep.subr.mxu0 0.0
  %154 = vmatpush1.xpose.msra.mxu0 0.0
  %155 = vmatprep.subr.mxu0 0.0
  %156 = vmatpush1.xpose.msra.mxu0 0.0
  %157 = vmatprep.subr.mxu0 0.0
  %158 = vmatpush1.xpose.msra.mxu0 0.0
  %159 = vmatprep.subr.mxu0 0.0
  %160 = vmatpush1.xpose.msra.mxu0 0.0
  %161 = vmatprep.subr.mxu0 0.0
  %162 = vmatpush1.xpose.msra.mxu0 0.0
  %163 = vmatprep.subr.mxu0 0.0
  %164 = vmatpush1.xpose.msra.mxu0 0.0
  %165 = vmatprep.subr.mxu0 0.0
  %166 = vmatpush1.xpose.msra.mxu0 0.0
  %167 = vmatprep.subr.mxu0 0.0
  %168 = vmatpush1.xpose.msra.mxu0 0.0
  %169 = vmatprep.subr.mxu0 0.0
  %170 = vmatpush1.xpose.msra.mxu0 0.0
  %171 = vmatprep.subr.mxu0 0.0
  %172 = vmatpush1.xpose.msra.mxu0 0.0
  %173 = vmatprep.subr.mxu0 0.0
  %174 = vmatpush1.xpose.msra.mxu0 0.0
  %175 = vmatprep.subr.mxu0 0.0
  %176 = vmatpush1.xpose.msra.mxu0 0.0
  %177 = vmatprep.subr.mxu0 0.0
  %178 = vmatpush1.xpose.msra.mxu0 0.0
  %179 = vmatprep.subr.mxu0 0.0
  %180 = vmatpush1.xpose.msra.mxu0 0.0
  %181 = vmatprep.mubr.f32.mxu0 0.0
  %182 = vmatmul.mubr.f32.gmra.mrb[0].mxu0 %v64
  %v183 = vpop.f32.mrb[0].mxu0
  %v184 = vadd.f32 %v55, %v183
  %v185 = vpop.f32.mrb[0].mxu0
  %186 = vmatprep.mubr.f32.mxu0 0.0
  %187 = vmatmul.mubr.f32.gmra.mrb[0].mxu0 %v67
  %v188 = vpop.f32.mrb[0].mxu0
  %v189 = vadd.f32 %v60, %v188
  %v190 = vpop.f32.mrb[0].mxu0
  %191 = vdwg.mxu0
  %v192 = vtanh.pop %v184
  %v193 = vtanh.pop %v189
  %v194 = vld [vmem:[%s3] sm:$0xff]
  %v195 = vld [vmem:[%s3 + $0x8] sm:$0xff]
  %v196 = vld [vmem:[%s3 + $0x10] sm:$0xff]
  %v197 = vld [vmem:[%s3 + $0x18] sm:$0xff]
  %v198 = vld [vmem:[%s4] sm:$0xff]
  %v199 = vld [vmem:[%s4 + $0x8] sm:$0xff]
  %v200 = vld [vmem:[%s4 + $0x10] sm:$0xff]
  %v201 = vld [vmem:[%s4 + $0x18] sm:$0xff]
  %203 = vset.pattern.permute.xlu0 0
  %204 = vperm.xlu0 %203, %v198
  %v205 = vpop.permute.xlu0 %204
  %208 = vset.pattern.permute.xlu0 0
  %209 = vperm.xlu0 %208, %v199
  %v210 = vpop.permute.xlu0 %209
  %213 = vset.pattern.permute.xlu0 0
  %214 = vperm.xlu0 %213, %v200
  %v215 = vpop.permute.xlu0 %214
  %218 = vset.pattern.permute.xlu0 0
  %219 = vperm.xlu0 %218, %v201
  %v220 = vpop.permute.xlu0 %219
  %vm222 = vcmask 130048
  %v224 = vsel %vm222, %v194, 0
  %v227 = vsel %vm222, %v195, 0
  %v230 = vsel %vm222, %v196, 0
  %v233 = vsel %vm222, %v197, 0
  %235 = vmatprep.subr.mxu0 0.0
  %236 = vmatpush1.msra.mxu0 %v192
  %237 = vmatprep.subr.mxu0 0.0
  %238 = vmatpush1.msra.mxu0 %v193
  %239 = vmatprep.subr.mxu0 0.0
  %240 = vmatpush1.msra.mxu0 0.0
  %241 = vmatprep.subr.mxu0 0.0
  %242 = vmatpush1.msra.mxu0 0.0
  %243 = vmatprep.subr.mxu0 0.0
  %244 = vmatpush1.msra.mxu0 0.0
  %245 = vmatprep.subr.mxu0 0.0
  %246 = vmatpush1.msra.mxu0 0.0
  %247 = vmatprep.subr.mxu0 0.0
  %248 = vmatpush1.msra.mxu0 0.0
  %249 = vmatprep.subr.mxu0 0.0
  %250 = vmatpush1.msra.mxu0 0.0
  %251 = vmatprep.subr.mxu0 0.0
  %252 = vmatpush1.msra.mxu0 0.0
  %253 = vmatprep.subr.mxu0 0.0
  %254 = vmatpush1.msra.mxu0 0.0
  %255 = vmatprep.subr.mxu0 0.0
  %256 = vmatpush1.msra.mxu0 0.0
  %257 = vmatprep.subr.mxu0 0.0
  %258 = vmatpush1.msra.mxu0 0.0
  %259 = vmatprep.subr.mxu0 0.0
  %260 = vmatpush1.msra.mxu0 0.0
  %261 = vmatprep.subr.mxu0 0.0
  %262 = vmatpush1.msra.mxu0 0.0
  %263 = vmatprep.subr.mxu0 0.0
  %264 = vmatpush1.msra.mxu0 0.0
  %265 = vmatprep.subr.mxu0 0.0
  %266 = vmatpush1.msra.mxu0 0.0
  %267 = vmatprep.subr.mxu0 0.0
  %268 = vmatpush1.msra.mxu0 0.0
  %269 = vmatprep.subr.mxu0 0.0
  %270 = vmatpush1.msra.mxu0 0.0
  %271 = vmatprep.subr.mxu0 0.0
  %272 = vmatpush1.msra.mxu0 0.0
  %273 = vmatprep.subr.mxu0 0.0
  %274 = vmatpush1.msra.mxu0 0.0
  %275 = vmatprep.subr.mxu0 0.0
  %276 = vmatpush1.msra.mxu0 0.0
  %277 = vmatprep.subr.mxu0 0.0
  %278 = vmatpush1.msra.mxu0 0.0
  %279 = vmatprep.subr.mxu0 0.0
  %280 = vmatpush1.msra.mxu0 0.0
  %281 = vmatprep.subr.mxu0 0.0
  %282 = vmatpush1.msra.mxu0 0.0
  %283 = vmatprep.subr.mxu0 0.0
  %284 = vmatpush1.msra.mxu0 0.0
  %285 = vmatprep.subr.mxu0 0.0
  %286 = vmatpush1.msra.mxu0 0.0
  %287 = vmatprep.subr.mxu0 0.0
  %288 = vmatpush1.msra.mxu0 0.0
  %289 = vmatprep.subr.mxu0 0.0
  %290 = vmatpush1.msra.mxu0 0.0
  %291 = vmatprep.subr.mxu0 0.0
  %292 = vmatpush1.msra.mxu0 0.0
  %293 = vmatprep.subr.mxu0 0.0
  %294 = vmatpush1.msra.mxu0 0.0
  %295 = vmatprep.subr.mxu0 0.0
  %296 = vmatpush1.msra.mxu0 0.0
  %297 = vmatprep.subr.mxu0 0.0
  %298 = vmatpush1.msra.mxu0 0.0
  %299 = vmatprep.mubr.f32.mxu0 0.0
  %300 = vmatmul.mubr.f32.gmra.mrb[0].mxu0 %v224
  %v301 = vpop.f32.mrb[0].mxu0
  %v302 = vadd.f32 %v205, %v301
  %v303 = vpop.f32.mrb[0].mxu0
  %304 = vmatprep.mubr.f32.mxu0 0.0
  %305 = vmatmul.mubr.f32.gmra.mrb[0].mxu0 %v227
  %v306 = vpop.f32.mrb[0].mxu0
  %v307 = vadd.f32 %v210, %v306
  %v308 = vpop.f32.mrb[0].mxu0
  %309 = vmatprep.mubr.f32.mxu0 0.0
  %310 = vmatmul.mubr.f32.gmra.mrb[0].mxu0 %v230
  %v311 = vpop.f32.mrb[0].mxu0
  %v312 = vadd.f32 %v215, %v311
  %v313 = vpop.f32.mrb[0].mxu0
  %314 = vmatprep.mubr.f32.mxu0 0.0
  %315 = vmatmul.mubr.f32.gmra.mrb[0].mxu0 %v233
  %v316 = vpop.f32.mrb[0].mxu0
  %v317 = vadd.f32 %v220, %v316
  %v318 = vpop.f32.mrb[0].mxu0
  %319 = vdwg.mxu0
  %v320 = vtanh.pop %v302
  %v321 = vtanh.pop %v307
  %v322 = vtanh.pop %v312
  %v323 = vtanh.pop %v317
  %v324 = vld [vmem:[%s5] sm:$0xff]
  %v325 = vld [vmem:[%s5 + $0x8] sm:$0xff]
  %v326 = vld [vmem:[%s5 + $0x10] sm:$0xff]
  %v327 = vld [vmem:[%s5 + $0x18] sm:$0xff]
  %v328 = vld [vmem:[%s5 + $0x20] sm:$0xff]
  %v329 = vld [vmem:[%s5 + $0x28] sm:$0xff]
  %v330 = vld [vmem:[%s5 + $0x30] sm:$0xff]
  %v331 = vld [vmem:[%s5 + $0x38] sm:$0xff]
  %v332 = vld [vmem:[%s6] sm:$0xff]
  %v333 = vld [vmem:[%s6 + $0x8] sm:$0xff]
  %v334 = vld [vmem:[%s6 + $0x10] sm:$0xff]
  %v335 = vld [vmem:[%s6 + $0x18] sm:$0xff]
  %v336 = vld [vmem:[%s6 + $0x20] sm:$0xff]
  %v337 = vld [vmem:[%s6 + $0x28] sm:$0xff]
  %v338 = vld [vmem:[%s6 + $0x30] sm:$0xff]
  %v339 = vld [vmem:[%s6 + $0x38] sm:$0xff]
  %341 = vset.pattern.permute.xlu0 0
  %342 = vperm.xlu0 %341, %v332
  %v343 = vpop.permute.xlu0 %342
  %346 = vset.pattern.permute.xlu0 0
  %347 = vperm.xlu0 %346, %v333
  %v348 = vpop.permute.xlu0 %347
  %351 = vset.pattern.permute.xlu0 0
  %352 = vperm.xlu0 %351, %v334
  %v353 = vpop.permute.xlu0 %352
  %356 = vset.pattern.permute.xlu0 0
  %357 = vperm.xlu0 %356, %v335
  %v358 = vpop.permute.xlu0 %357
  %361 = vset.pattern.permute.xlu0 0
  %362 = vperm.xlu0 %361, %v336
  %v363 = vpop.permute.xlu0 %362
  %366 = vset.pattern.permute.xlu0 0
  %367 = vperm.xlu0 %366, %v337
  %v368 = vpop.permute.xlu0 %367
  %371 = vset.pattern.permute.xlu0 0
  %372 = vperm.xlu0 %371, %v338
  %v373 = vpop.permute.xlu0 %372
  %376 = vset.pattern.permute.xlu0 0
  %377 = vperm.xlu0 %376, %v339
  %v378 = vpop.permute.xlu0 %377
  %vm380 = vcmask 261120
  %v382 = vsel %vm380, %v324, 0
  %v385 = vsel %vm380, %v325, 0
  %v388 = vsel %vm380, %v326, 0
  %v391 = vsel %vm380, %v327, 0
  %v394 = vsel %vm380, %v328, 0
  %v397 = vsel %vm380, %v329, 0
  %v400 = vsel %vm380, %v330, 0
  %v403 = vsel %vm380, %v331, 0
  %405 = vmatprep.subr.mxu0 0.0
  %406 = vmatpush1.msra.mxu0 %v320
  %407 = vmatprep.subr.mxu0 0.0
  %408 = vmatpush1.msra.mxu0 %v321
  %409 = vmatprep.subr.mxu0 0.0
  %410 = vmatpush1.msra.mxu0 %v322
  %411 = vmatprep.subr.mxu0 0.0
  %412 = vmatpush1.msra.mxu0 %v323
  %413 = vmatprep.subr.mxu0 0.0
  %414 = vmatpush1.msra.mxu0 0.0
  %415 = vmatprep.subr.mxu0 0.0
  %416 = vmatpush1.msra.mxu0 0.0
  %417 = vmatprep.subr.mxu0 0.0
  %418 = vmatpush1.msra.mxu0 0.0
  %419 = vmatprep.subr.mxu0 0.0
  %420 = vmatpush1.msra.mxu0 0.0
  %421 = vmatprep.subr.mxu0 0.0
  %422 = vmatpush1.msra.mxu0 0.0
  %423 = vmatprep.subr.mxu0 0.0
  %424 = vmatpush1.msra.mxu0 0.0
  %425 = vmatprep.subr.mxu0 0.0
  %426 = vmatpush1.msra.mxu0 0.0
  %427 = vmatprep.subr.mxu0 0.0
  %428 = vmatpush1.msra.mxu0 0.0
  %429 = vmatprep.subr.mxu0 0.0
  %430 = vmatpush1.msra.mxu0 0.0
  %431 = vmatprep.subr.mxu0 0.0
  %432 = vmatpush1.msra.mxu0 0.0
  %433 = vmatprep.subr.mxu0 0.0
  %434 = vmatpush1.msra.mxu0 0.0
  %435 = vmatprep.subr.mxu0 0.0
  %436 = vmatpush1.msra.mxu0 0.0
  %437 = vmatprep.subr.mxu0 0.0
  %438 = vmatpush1.msra.mxu0 0.0
  %439 = vmatprep.subr.mxu0 0.0
  %440 = vmatpush1.msra.mxu0 0.0
  %441 = vmatprep.subr.mxu0 0.0
  %442 = vmatpush1.msra.mxu0 0.0
  %443 = vmatprep.subr.mxu0 0.0
  %444 = vmatpush1.msra.mxu0 0.0
  %445 = vmatprep.subr.mxu0 0.0
  %446 = vmatpush1.msra.mxu0 0.0
  %447 = vmatprep.subr.mxu0 0.0
  %448 = vmatpush1.msra.mxu0 0.0
  %449 = vmatprep.subr.mxu0 0.0
  %450 = vmatpush1.msra.mxu0 0.0
  %451 = vmatprep.subr.mxu0 0.0
  %452 = vmatpush1.msra.mxu0 0.0
  %453 = vmatprep.subr.mxu0 0.0
  %454 = vmatpush1.msra.mxu0 0.0
  %455 = vmatprep.subr.mxu0 0.0
  %456 = vmatpush1.msra.mxu0 0.0
  %457 = vmatprep.subr.mxu0 0.0
  %458 = vmatpush1.msra.mxu0 0.0
  %459 = vmatprep.subr.mxu0 0.0
  %460 = vmatpush1.msra.mxu0 0.0
  %461 = vmatprep.subr.mxu0 0.0
  %462 = vmatpush1.msra.mxu0 0.0
  %463 = vmatprep.subr.mxu0 0.0
  %464 = vmatpush1.msra.mxu0 0.0
  %465 = vmatprep.subr.mxu0 0.0
  %466 = vmatpush1.msra.mxu0 0.0
  %467 = vmatprep.subr.mxu0 0.0
  %468 = vmatpush1.msra.mxu0 0.0
  %469 = vmatprep.mubr.f32.mxu0 0.0
  %470 = vmatmul.mubr.f32.gmra.mrb[0].mxu0 %v382
  %v471 = vpop.f32.mrb[0].mxu0
  %v472 = vadd.f32 %v343, %v471
  %v473 = vpop.f32.mrb[0].mxu0
  %474 = vmatprep.mubr.f32.mxu0 0.0
  %475 = vmatmul.mubr.f32.gmra.mrb[0].mxu0 %v385
  %v476 = vpop.f32.mrb[0].mxu0
  %v477 = vadd.f32 %v348, %v476
  %v478 = vpop.f32.mrb[0].mxu0
  %479 = vmatprep.mubr.f32.mxu0 0.0
  %480 = vmatmul.mubr.f32.gmra.mrb[0].mxu0 %v388
  %v481 = vpop.f32.mrb[0].mxu0
  %v482 = vadd.f32 %v353, %v481
  %v483 = vpop.f32.mrb[0].mxu0
  %484 = vmatprep.mubr.f32.mxu0 0.0
  %485 = vmatmul.mubr.f32.gmra.mrb[0].mxu0 %v391
  %v486 = vpop.f32.mrb[0].mxu0
  %v487 = vadd.f32 %v358, %v486
  %v488 = vpop.f32.mrb[0].mxu0
  %489 = vmatprep.mubr.f32.mxu0 0.0
  %490 = vmatmul.mubr.f32.gmra.mrb[0].mxu0 %v394
  %v491 = vpop.f32.mrb[0].mxu0
  %v492 = vadd.f32 %v363, %v491
  %v493 = vpop.f32.mrb[0].mxu0
  %494 = vmatprep.mubr.f32.mxu0 0.0
  %495 = vmatmul.mubr.f32.gmra.mrb[0].mxu0 %v397
  %v496 = vpop.f32.mrb[0].mxu0
  %v497 = vadd.f32 %v368, %v496
  %v498 = vpop.f32.mrb[0].mxu0
  %499 = vmatprep.mubr.f32.mxu0 0.0
  %500 = vmatmul.mubr.f32.gmra.mrb[0].mxu0 %v400
  %v501 = vpop.f32.mrb[0].mxu0
  %v502 = vadd.f32 %v373, %v501
  %v503 = vpop.f32.mrb[0].mxu0
  %504 = vmatprep.mubr.f32.mxu0 0.0
  %505 = vmatmul.mubr.f32.gmra.mrb[0].mxu0 %v403
  %v506 = vpop.f32.mrb[0].mxu0
  %v507 = vadd.f32 %v378, %v506
  %v508 = vpop.f32.mrb[0].mxu0
  %509 = vdwg.mxu0
  %v510 = vtanh.pop %v472
  %v511 = vtanh.pop %v477
  %v512 = vtanh.pop %v482
  %v513 = vtanh.pop %v487
  %v514 = vtanh.pop %v492
  %v515 = vtanh.pop %v497
  %v516 = vtanh.pop %v502
  %v517 = vtanh.pop %v507
  %v518 = vld [vmem:[%s7] sm:$0xff]
  %v519 = vld [vmem:[%s8] sm:$0xff]
  %521 = vset.pattern.permute.xlu0 0
  %522 = vperm.xlu0 %521, %v519
  %v523 = vpop.permute.xlu0 %522
  %vm525 = vcmask 523264
  %v527 = vsel %vm525, %v518, 0
  %529 = vmatprep.subr.mxu0 0.0
  %530 = vmatpush1.msra.mxu0 %v510
  %531 = vmatprep.subr.mxu0 0.0
  %532 = vmatpush1.msra.mxu0 %v511
  %533 = vmatprep.subr.mxu0 0.0
  %534 = vmatpush1.msra.mxu0 %v512
  %535 = vmatprep.subr.mxu0 0.0
  %536 = vmatpush1.msra.mxu0 %v513
  %537 = vmatprep.subr.mxu0 0.0
  %538 = vmatpush1.msra.mxu0 %v514
  %539 = vmatprep.subr.mxu0 0.0
  %540 = vmatpush1.msra.mxu0 %v515
  %541 = vmatprep.subr.mxu0 0.0
  %542 = vmatpush1.msra.mxu0 %v516
  %543 = vmatprep.subr.mxu0 0.0
  %544 = vmatpush1.msra.mxu0 %v517
  %545 = vmatprep.subr.mxu0 0.0
  %546 = vmatpush1.msra.mxu0 0.0
  %547 = vmatprep.subr.mxu0 0.0
  %548 = vmatpush1.msra.mxu0 0.0
  %549 = vmatprep.subr.mxu0 0.0
  %550 = vmatpush1.msra.mxu0 0.0
  %551 = vmatprep.subr.mxu0 0.0
  %552 = vmatpush1.msra.mxu0 0.0
  %553 = vmatprep.subr.mxu0 0.0
  %554 = vmatpush1.msra.mxu0 0.0
  %555 = vmatprep.subr.mxu0 0.0
  %556 = vmatpush1.msra.mxu0 0.0
  %557 = vmatprep.subr.mxu0 0.0
  %558 = vmatpush1.msra.mxu0 0.0
  %559 = vmatprep.subr.mxu0 0.0
  %560 = vmatpush1.msra.mxu0 0.0
  %561 = vmatprep.subr.mxu0 0.0
  %562 = vmatpush1.msra.mxu0 0.0
  %563 = vmatprep.subr.mxu0 0.0
  %564 = vmatpush1.msra.mxu0 0.0
  %565 = vmatprep.subr.mxu0 0.0
  %566 = vmatpush1.msra.mxu0 0.0
  %567 = vmatprep.subr.mxu0 0.0
  %568 = vmatpush1.msra.mxu0 0.0
  %569 = vmatprep.subr.mxu0 0.0
  %570 = vmatpush1.msra.mxu0 0.0
  %571 = vmatprep.subr.mxu0 0.0
  %572 = vmatpush1.msra.mxu0 0.0
  %573 = vmatprep.subr.mxu0 0.0
  %574 = vmatpush1.msra.mxu0 0.0
  %575 = vmatprep.subr.mxu0 0.0
  %576 = vmatpush1.msra.mxu0 0.0
  %577 = vmatprep.subr.mxu0 0.0
  %578 = vmatpush1.msra.mxu0 0.0
  %579 = vmatprep.subr.mxu0 0.0
  %580 = vmatpush1.msra.mxu0 0.0
  %581 = vmatprep.subr.mxu0 0.0
  %582 = vmatpush1.msra.mxu0 0.0
  %583 = vmatprep.subr.mxu0 0.0
  %584 = vmatpush1.msra.mxu0 0.0
  %585 = vmatprep.subr.mxu0 0.0
  %586 = vmatpush1.msra.mxu0 0.0
  %587 = vmatprep.subr.mxu0 0.0
  %588 = vmatpush1.msra.mxu0 0.0
  %589 = vmatprep.subr.mxu0 0.0
  %590 = vmatpush1.msra.mxu0 0.0
  %591 = vmatprep.subr.mxu0 0.0
  %592 = vmatpush1.msra.mxu0 0.0
  %593 = vmatprep.mubr.f32.mxu0 0.0
  %594 = vmatmul.mubr.f32.gmra.mrb[0].mxu0 %v527
  %v595 = vpop.f32.mrb[0].mxu0
  %v596 = vadd.f32 %v523, %v595
  %v597 = vpop.f32.mrb[0].mxu0
  %598 = vdwg.mxu0
  %599 = vst [vmem:[%s9] sm:$0xff] %v596
  // Predicated region
  $region38: #{dqn_forward.1} parent=0 // pred_check
    _
  $region39: #{dqn_forward.1} parent=0 // pred_check_branch
    %601 = sbr.rel (0) target = $region41
  $region40: #{dqn_forward.1} parent=0 // pred_region
    _
  $region41: #{dqn_forward.1} parent=0 // pred_fallthru
    _
  // Predicated region
  $region42: #{dqn_forward.1} parent=0 // pred_check
    _
  $region43: #{dqn_forward.1} parent=0 // pred_check_branch
    %603 = sbr.rel (0) target = $region45
  $region44: #{dqn_forward.1} parent=0 // pred_region
    _
  $region45: #{dqn_forward.1} parent=0 // pred_fallthru
    _

</llo_original>
